<compile_context>
chip_gen: v7x
topology: tpu7x:2x2x1
jax: 0.10.0
libtpu: 0.0.40
codegen_flags: <defaults>
</compile_context>

<pallas_src>
import jax
import jax.numpy as jnp
from jax.experimental import pallas as pl
from jax.experimental.pallas import tpu as pltpu


# ---------------------------------------------------------------------------
# Kernel
# ---------------------------------------------------------------------------
def _mlp_kernel(x_ref, w1_ref, b1_ref, w2_ref, b2_ref, o_ref):
    # Layer 1 on the MXU with f32 accumulation; bias-add + ReLU on the VPU.
    h = jnp.dot(x_ref[...], w1_ref[...], preferred_element_type=jnp.float32)
    h = jnp.maximum(h + b1_ref[...].astype(jnp.float32), 0.0)  # b1 is (1, hidden)
    # Layer 2: cast the activation down to W2's dtype (no-op for f32 weights,
    # keeps the MXU on its native bf16 pass for bf16 weights); accumulate in f32.
    out = jnp.dot(h.astype(w2_ref.dtype), w2_ref[...],
                  preferred_element_type=jnp.float32)
    out = out + b2_ref[...].astype(jnp.float32)                # b2 is (1, n_out)
    o_ref[...] = out.astype(o_ref.dtype)


# ---------------------------------------------------------------------------
# Helpers
# ---------------------------------------------------------------------------
def _round_up(n, m):
    return ((n + m - 1) // m) * m


def _lane_pad(n):
    return 128 * pl.cdiv(n, 128)


# Small-path VMEM guard (f32 lane-padded x + h + out per row, conservative).
_SMALL_PATH_VMEM_BYTES = 12 << 20
# Above this batch, the 4->128 output lane-padding inflates HBM writeback too
# much (32x); fall back to minimal-byte masked stores instead.
_LANE_PAD_BATCH_CUTOFF = 1 << 16


def _small_path_vmem_bytes(batch, obs, hidden, n_actions):
    rows = _round_up(max(batch, 1), 8)
    per_row = (_lane_pad(obs) + _lane_pad(hidden) + _lane_pad(n_actions)) * 4
    return rows * per_row


def _cost_estimate(batch, obs, hidden, n_actions, n_out, itemsize):
    # Advisory hint so XLA does not serialize neighbors around this call.
    flops = 2 * batch * (obs * hidden + hidden * n_out)
    bytes_accessed = itemsize * (
        batch * obs + obs * hidden + hidden
        + hidden * n_out + n_out + batch * n_out)
    return pl.CostEstimate(flops=flops, transcendentals=0,
                           bytes_accessed=bytes_accessed)


# ---------------------------------------------------------------------------
# One-time parameter preparation (hoisted out of the per-call wrapper)
# ---------------------------------------------------------------------------
def prepare_params(w1, b1, w2, b2):
    """Build 2-D biases and lane-padded W2/b2 once (cache alongside the params)."""
    obs, hidden = w1.shape
    n_actions = w2.shape[1]
    n_pad = _lane_pad(n_actions)
    b1_2d = b1.reshape(1, hidden)
    b2_2d = b2.reshape(1, n_actions)
    w2p = jnp.zeros((hidden, n_pad), w2.dtype).at[:, :n_actions].set(w2)
    b2p = jnp.zeros((1, n_pad), b2.dtype).at[:, :n_actions].set(b2)
    return dict(w1=w1, b1_2d=b1_2d, w2=w2, b2_2d=b2_2d, w2p=w2p, b2p=b2p,
                obs=obs, hidden=hidden, n_actions=n_actions, n_pad=n_pad)


# ---------------------------------------------------------------------------
# Forward paths
# ---------------------------------------------------------------------------
def _net_forward_small(x, p):
    """Single-block path: whole operands in VMEM, no grid, no pipelining."""
    batch, obs = x.shape
    n_actions = p["n_actions"]
    cost = _cost_estimate(batch, obs, p["hidden"], n_actions, n_actions,
                          jnp.dtype(x.dtype).itemsize)
    vmem = pl.BlockSpec(memory_space=pltpu.MemorySpace.VMEM)
    return pl.pallas_call(
        _mlp_kernel,
        out_shape=jax.ShapeDtypeStruct((batch, n_actions), x.dtype),
        in_specs=[vmem, vmem, vmem, vmem, vmem],
        out_specs=vmem,
        cost_estimate=cost,
    )(x, p["w1"], p["b1_2d"], p["w2"], p["b2_2d"])


def _net_forward_tiled(x, p, batch_tile):
    """Batch-tiled path: weights resident across grid steps, x/out streamed."""
    batch, obs = x.shape
    hidden = p["hidden"]
    n_actions = p["n_actions"]

    # Lane-dense (128-wide, dense vst) output at moderate batch; minimal-byte
    # masked stores at rollout-scale batch where padded writeback dominates.
    use_lane_pad = batch < _LANE_PAD_BATCH_CUTOFF
    if use_lane_pad:
        w2_used, b2_used, n_out = p["w2p"], p["b2p"], p["n_pad"]
    else:
        w2_used, b2_used, n_out = p["w2"], p["b2_2d"], n_actions

    # Keep at least 2 grid steps (v7x: both TensorCores) but never exceed
    # batch_tile (default 4096 keeps double-buffered VMEM well under v7x's
    # 32 MiB scoped default on all generations).
    tm = min(batch_tile, _round_up(pl.cdiv(batch, 2), 8))
    tm = max(tm, 8)
    n_tiles = pl.cdiv(batch, tm)

    cost = _cost_estimate(batch, obs, hidden, n_actions, n_out,
                          jnp.dtype(x.dtype).itemsize)

    # No explicit batch padding: out_shape rows == batch; the ragged last block
    # is masked by Pallas (OOB x reads only feed dropped OOB output rows).
    out = pl.pallas_call(
        _mlp_kernel,
        out_shape=jax.ShapeDtypeStruct((batch, n_out), x.dtype),
        grid=(n_tiles,),
        in_specs=[
            pl.BlockSpec((tm, obs), lambda i: (i, 0)),         # x streams over batch
            pl.BlockSpec((obs, hidden), lambda i: (0, 0)),     # W1 resident
            pl.BlockSpec((1, hidden), lambda i: (0, 0)),       # b1 resident
            pl.BlockSpec((hidden, n_out), lambda i: (0, 0)),   # W2 resident
            pl.BlockSpec((1, n_out), lambda i: (0, 0)),        # b2 resident
        ],
        out_specs=pl.BlockSpec((tm, n_out), lambda i: (i, 0)),
        compiler_params=pltpu.CompilerParams(
            # Batch tiles are independent: "parallel" lets v7x shard them
            # across both TensorCores (no effect on v5e/v6e).
            dimension_semantics=("parallel",)),
        cost_estimate=cost,
    )(x, p["w1"], p["b1_2d"], w2_used, b2_used)

    return out[:, :n_actions] if use_lane_pad else out


def net_forward(x, params, *, batch_tile=4096):
    """Forward pass of Net: (B, obs_size) -> (B, n_actions)."""
    batch, obs = x.shape
    small_ok = (
        batch <= batch_tile
        and _small_path_vmem_bytes(batch, obs, params["hidden"],
                                   params["n_actions"]) <= _SMALL_PATH_VMEM_BYTES
    )
    if small_ok:
        return _net_forward_small(x, params)
    return _net_forward_tiled(x, params, batch_tile)


# ---------------------------------------------------------------------------
# Init + pure-JAX reference
# ---------------------------------------------------------------------------
def init_params(key, obs_size, hidden, n_actions, dtype=jnp.float32):
    """Deterministic init mimicking nn.Linear's U(-1/sqrt(fan_in), 1/sqrt(fan_in))."""
    k1, k2, k3, k4 = jax.random.split(key, 4)
    lim1 = 1.0 / jnp.sqrt(jnp.float32(obs_size))
    lim2 = 1.0 / jnp.sqrt(jnp.float32(hidden))
    w1 = jax.random.uniform(k1, (obs_size, hidden), dtype, -lim1, lim1)
    b1 = jax.random.uniform(k2, (hidden,), dtype, -lim1, lim1)
    w2 = jax.random.uniform(k3, (hidden, n_actions), dtype, -lim2, lim2)
    b2 = jax.random.uniform(k4, (n_actions,), dtype, -lim2, lim2)
    return w1, b1, w2, b2


def net_forward_ref(x, w1, b1, w2, b2):
    """Plain-JAX reference matching the PyTorch forward exactly."""
    h = jnp.maximum(x @ w1 + b1, 0.0)
    return h @ w2 + b2


# ---------------------------------------------------------------------------
# Demo / self-test
# ---------------------------------------------------------------------------
if __name__ == "__main__":
    # Small shapes consistent with the module (Titanic env -> small obs / actions).
    obs_size, hidden, n_actions = 8, 32, 4

    key = jax.random.PRNGKey(0)
    kx, kp, kx2 = jax.random.split(key, 3)
    w1, b1, w2, b2 = init_params(kp, obs_size, hidden, n_actions)
    params = prepare_params(w1, b1, w2, b2)   # one-time padded-weight prep

    # --- small-batch path (no grid, whole-operand VMEM residency) ---
    batch = 8
    x = jax.random.normal(kx, (batch, obs_size), jnp.float32)
    out = jax.block_until_ready(net_forward(x, params))
    ref = net_forward_ref(x, w1, b1, w2, b2)
    assert out.shape == (batch, n_actions)
    assert jnp.allclose(out, ref, atol=1e-5, rtol=1e-5)

    # --- batch-tiled path: streaming x, resident weights, lane-dense output,
    #     ragged last block (1000 % 256 != 0) exercises the no-pad masking ---
    big_batch = 1000
    xb = jax.random.normal(kx2, (big_batch, obs_size), jnp.float32)
    out_b = jax.block_until_ready(net_forward(xb, params, batch_tile=256))
    ref_b = net_forward_ref(xb, w1, b1, w2, b2)
    assert out_b.shape == (big_batch, n_actions)
    assert jnp.allclose(out_b, ref_b, atol=1e-5, rtol=1e-5)

    print("KERNEL_OK")
</pallas_src>

<mosaic_0001>
module attributes {stable_mosaic.version = 11 : i64} {
  func.func @_mlp_kernel(%arg0: memref<8x8xf32, #tpu.memory_space<vmem>>, %arg1: memref<8x32xf32, #tpu.memory_space<vmem>>, %arg2: memref<1x32xf32, #tpu.memory_space<vmem>>, %arg3: memref<32x4xf32, #tpu.memory_space<vmem>>, %arg4: memref<1x4xf32, #tpu.memory_space<vmem>>, %arg5: memref<8x4xf32, #tpu.memory_space<vmem>>) attributes {dimension_semantics = [], scalar_prefetch = 0 : i64, scratch_operands = 0 : i64, tpu.core_type = #tpu.core_type<tc>} {
    %c0 = arith.constant 0 : index
    %c0_0 = arith.constant 0 : index
    %0 = vector.load %arg0[%c0, %c0_0] : memref<8x8xf32, #tpu.memory_space<vmem>>, vector<8x8xf32>
    %c0_1 = arith.constant 0 : index
    %c0_2 = arith.constant 0 : index
    %1 = vector.load %arg1[%c0_1, %c0_2] : memref<8x32xf32, #tpu.memory_space<vmem>>, vector<8x32xf32>
    %cst = arith.constant dense<0.000000e+00> : vector<8x32xf32>
    %2 = tpu.matmul %0, %1, %cst {dimension_numbers = #tpu.dot_dimension_numbers<[1], [0], [0], [1], [0, 0, 1, 1], [], []>} : vector<8x8xf32>, vector<8x32xf32>, vector<8x32xf32> -> vector<8x32xf32>
    %c0_3 = arith.constant 0 : index
    %c0_4 = arith.constant 0 : index
    %3 = vector.load %arg2[%c0_3, %c0_4] : memref<1x32xf32, #tpu.memory_space<vmem>>, vector<1x32xf32>
    %4 = vector.broadcast %3 : vector<1x32xf32> to vector<8x32xf32>
    %5 = arith.addf %2, %4 : vector<8x32xf32>
    %cst_5 = arith.constant 0.000000e+00 : f32
    %6 = vector.broadcast %cst_5 : f32 to vector<8x32xf32>
    %7 = arith.maximumf %5, %6 : vector<8x32xf32>
    %c0_6 = arith.constant 0 : index
    %c0_7 = arith.constant 0 : index
    %8 = vector.load %arg3[%c0_6, %c0_7] : memref<32x4xf32, #tpu.memory_space<vmem>>, vector<32x4xf32>
    %cst_8 = arith.constant dense<0.000000e+00> : vector<8x4xf32>
    %9 = tpu.matmul %7, %8, %cst_8 {dimension_numbers = #tpu.dot_dimension_numbers<[1], [0], [0], [1], [0, 0, 1, 1], [], []>} : vector<8x32xf32>, vector<32x4xf32>, vector<8x4xf32> -> vector<8x4xf32>
    %c0_9 = arith.constant 0 : index
    %c0_10 = arith.constant 0 : index
    %10 = vector.load %arg4[%c0_9, %c0_10] : memref<1x4xf32, #tpu.memory_space<vmem>>, vector<1x4xf32>
    %11 = vector.broadcast %10 : vector<1x4xf32> to vector<8x4xf32>
    %12 = arith.addf %9, %11 : vector<8x4xf32>
    %c0_11 = arith.constant 0 : index
    %c0_12 = arith.constant 0 : index
    %13 = vector.load %arg5[%c0_11, %c0_12] : memref<8x4xf32, #tpu.memory_space<vmem>>, vector<8x4xf32>
    tpu.vector_store %arg5[%c0_11, %c0_12], %12 {strides = array<i32>} : memref<8x4xf32, #tpu.memory_space<vmem>>, vector<8x4xf32>,
    return
  }
}

</mosaic_0001>

<llo_original>
// kernel: tpu_custom_call.1
$region0: #{tpu_custom_call.1}
  #allocation0 [shape = 'u32[]', space=smem, size = 0x4, offset = 0x4, fixed_abs, tag = 'smem constant byte address 0x4 - core index']
  #allocation1 [shape = 'u32[144,128]{1,0:T(1,128)}', space=vmem, size = 0x12000, scoped, tag = 'internal scratch']
  %s0 = inlined_call_operand.vmem [shape: f32[8,8], index: 0, kind: input, shape index: {}]
  %s1 = inlined_call_operand.vmem [shape: f32[8,32], index: 1, kind: input, shape index: {}]
  %s2 = inlined_call_operand.vmem [shape: f32[1,32], index: 2, kind: input, shape index: {}]
  %s3 = inlined_call_operand.vmem [shape: f32[32,4], index: 3, kind: input, shape index: {}]
  %s4 = inlined_call_operand.vmem [shape: f32[1,4], index: 4, kind: input, shape index: {}]
  %s5 = inlined_call_operand.vmem [shape: f32[8,4], index: 5, kind: output, shape index: {}]
  %s6 = sld [smem:[#allocation0]]
  $region30: #{tpu_custom_call.1} parent=0
    _
  %s8 = ssub.s32 1, %s6
  %s9 = scalar_select 0, %s8, %s6
  // Predicated region
  $region2: #{tpu_custom_call.1} parent=0 // pred_check
    _
  $region3: #{tpu_custom_call.1} parent=0 // pred_check_branch
    %11 = sbr.rel (0) target = $region5
  $region4: #{tpu_custom_call.1} parent=0 // pred_region
    _
  $region5: #{tpu_custom_call.1} parent=0 // pred_fallthru
    _
  // Predicated region
  $region6: #{tpu_custom_call.1} parent=0 // pred_check
    _
  $region7: #{tpu_custom_call.1} parent=0 // pred_check_branch
    %13 = sbr.rel (0) target = $region9
  $region8: #{tpu_custom_call.1} parent=0 // pred_region
    _
  $region9: #{tpu_custom_call.1} parent=0 // pred_fallthru
    _
  // Predicated region
  $region10: #{tpu_custom_call.1} parent=0 // pred_check
    _
  $region11: #{tpu_custom_call.1} parent=0 // pred_check_branch
    %15 = sbr.rel (0) target = $region13
  $region12: #{tpu_custom_call.1} parent=0 // pred_region
    _
  $region13: #{tpu_custom_call.1} parent=0 // pred_fallthru
    _
  // Predicated region
  $region14: #{tpu_custom_call.1} parent=0 // pred_check
    _
  $region15: #{tpu_custom_call.1} parent=0 // pred_check_branch
    %17 = sbr.rel (0) target = $region17
  $region16: #{tpu_custom_call.1} parent=0 // pred_region
    _
  $region17: #{tpu_custom_call.1} parent=0 // pred_fallthru
    _
  // Predicated region
  $region18: #{tpu_custom_call.1} parent=0 // pred_check
    _
  $region19: #{tpu_custom_call.1} parent=0 // pred_check_branch
    %19 = sbr.rel (0) target = $region21
  $region20: #{tpu_custom_call.1} parent=0 // pred_region
    _
  $region21: #{tpu_custom_call.1} parent=0 // pred_fallthru
    _
  %v20 = vld [vmem:[%s0] sm:$0xff]
  %v21 = vld [vmem:[%s1] sm:$0xff]
  %v22 = vld [vmem:[%s2] sm:$0x1]
  %v24 = vlaneseq
  %v25 = vshrl.u32 %v24, 7
  %v26 = vsub.s32 0, %v25
  %v27 = vrot.slane %v22, %v26
  %vm29 = vcmask 64512
  %v31 = vsel %vm29, %v20, 0
  %33 = vmatprep.subr.mxu0 0.0
  %34 = vmatpush1.msra.mxu0 %v21
  %35 = vmatprep.subr.mxu0 0.0
  %36 = vmatpush1.msra.mxu0 0.0
  %37 = vmatprep.subr.mxu0 0.0
  %38 = vmatpush1.msra.mxu0 0.0
  %39 = vmatprep.subr.mxu0 0.0
  %40 = vmatpush1.msra.mxu0 0.0
  %41 = vmatprep.subr.mxu0 0.0
  %42 = vmatpush1.msra.mxu0 0.0
  %43 = vmatprep.subr.mxu0 0.0
  %44 = vmatpush1.msra.mxu0 0.0
  %45 = vmatprep.subr.mxu0 0.0
  %46 = vmatpush1.msra.mxu0 0.0
  %47 = vmatprep.subr.mxu0 0.0
  %48 = vmatpush1.msra.mxu0 0.0
  %49 = vmatprep.subr.mxu0 0.0
  %50 = vmatpush1.msra.mxu0 0.0
  %51 = vmatprep.subr.mxu0 0.0
  %52 = vmatpush1.msra.mxu0 0.0
  %53 = vmatprep.subr.mxu0 0.0
  %54 = vmatpush1.msra.mxu0 0.0
  %55 = vmatprep.subr.mxu0 0.0
  %56 = vmatpush1.msra.mxu0 0.0
  %57 = vmatprep.subr.mxu0 0.0
  %58 = vmatpush1.msra.mxu0 0.0
  %59 = vmatprep.subr.mxu0 0.0
  %60 = vmatpush1.msra.mxu0 0.0
  %61 = vmatprep.subr.mxu0 0.0
  %62 = vmatpush1.msra.mxu0 0.0
  %63 = vmatprep.subr.mxu0 0.0
  %64 = vmatpush1.msra.mxu0 0.0
  %65 = vmatprep.subr.mxu0 0.0
  %66 = vmatpush1.msra.mxu0 0.0
  %67 = vmatprep.subr.mxu0 0.0
  %68 = vmatpush1.msra.mxu0 0.0
  %69 = vmatprep.subr.mxu0 0.0
  %70 = vmatpush1.msra.mxu0 0.0
  %71 = vmatprep.subr.mxu0 0.0
  %72 = vmatpush1.msra.mxu0 0.0
  %73 = vmatprep.subr.mxu0 0.0
  %74 = vmatpush1.msra.mxu0 0.0
  %75 = vmatprep.subr.mxu0 0.0
  %76 = vmatpush1.msra.mxu0 0.0
  %77 = vmatprep.subr.mxu0 0.0
  %78 = vmatpush1.msra.mxu0 0.0
  %79 = vmatprep.subr.mxu0 0.0
  %80 = vmatpush1.msra.mxu0 0.0
  %81 = vmatprep.subr.mxu0 0.0
  %82 = vmatpush1.msra.mxu0 0.0
  %83 = vmatprep.subr.mxu0 0.0
  %84 = vmatpush1.msra.mxu0 0.0
  %85 = vmatprep.subr.mxu0 0.0
  %86 = vmatpush1.msra.mxu0 0.0
  %87 = vmatprep.subr.mxu0 0.0
  %88 = vmatpush1.msra.mxu0 0.0
  %89 = vmatprep.subr.mxu0 0.0
  %90 = vmatpush1.msra.mxu0 0.0
  %91 = vmatprep.subr.mxu0 0.0
  %92 = vmatpush1.msra.mxu0 0.0
  %93 = vmatprep.subr.mxu0 0.0
  %94 = vmatpush1.msra.mxu0 0.0
  %95 = vmatprep.subr.mxu0 0.0
  %96 = vmatpush1.msra.mxu0 0.0
  %97 = vmatprep.mubr.f32.mxu0 0.0
  %98 = vmatmul.mubr.f32.gmra.mrb[0].mxu0 %v31
  %v99 = vpop.f32.mrb[0].mxu0
  %v100 = vadd.f32 %v27, %v99
  %v101 = vpop.f32.mrb[0].mxu0
  %102 = vdwg.mxu0
  %v103 = vmax.f32 %v100, 0.0
  %v104 = vld [vmem:[%s3] sm:$0xff]
  %v105 = vld [vmem:[%s3 + $0x8] sm:$0xff]
  %v106 = vld [vmem:[%s3 + $0x10] sm:$0xff]
  %v107 = vld [vmem:[%s3 + $0x18] sm:$0xff]
  %v108 = vld [vmem:[%s4] sm:$0x1]
  %v110 = vlaneseq
  %v111 = vshrl.u32 %v110, 7
  %v112 = vsub.s32 0, %v111
  %v113 = vrot.slane %v108, %v112
  %vm115 = vcmask 261120
  %v117 = vsel %vm115, %v103, 0
  %119 = vmatprep.subr.mxu0 0.0
  %120 = vmatpush1.msra.mxu0 %v104
  %121 = vmatprep.subr.mxu0 0.0
  %122 = vmatpush1.msra.mxu0 %v105
  %123 = vmatprep.subr.mxu0 0.0
  %124 = vmatpush1.msra.mxu0 %v106
  %125 = vmatprep.subr.mxu0 0.0
  %126 = vmatpush1.msra.mxu0 %v107
  %127 = vmatprep.subr.mxu0 0.0
  %128 = vmatpush1.msra.mxu0 0.0
  %129 = vmatprep.subr.mxu0 0.0
  %130 = vmatpush1.msra.mxu0 0.0
  %131 = vmatprep.subr.mxu0 0.0
  %132 = vmatpush1.msra.mxu0 0.0
  %133 = vmatprep.subr.mxu0 0.0
  %134 = vmatpush1.msra.mxu0 0.0
  %135 = vmatprep.subr.mxu0 0.0
  %136 = vmatpush1.msra.mxu0 0.0
  %137 = vmatprep.subr.mxu0 0.0
  %138 = vmatpush1.msra.mxu0 0.0
  %139 = vmatprep.subr.mxu0 0.0
  %140 = vmatpush1.msra.mxu0 0.0
  %141 = vmatprep.subr.mxu0 0.0
  %142 = vmatpush1.msra.mxu0 0.0
  %143 = vmatprep.subr.mxu0 0.0
  %144 = vmatpush1.msra.mxu0 0.0
  %145 = vmatprep.subr.mxu0 0.0
  %146 = vmatpush1.msra.mxu0 0.0
  %147 = vmatprep.subr.mxu0 0.0
  %148 = vmatpush1.msra.mxu0 0.0
  %149 = vmatprep.subr.mxu0 0.0
  %150 = vmatpush1.msra.mxu0 0.0
  %151 = vmatprep.subr.mxu0 0.0
  %152 = vmatpush1.msra.mxu0 0.0
  %153 = vmatprep.subr.mxu0 0.0
  %154 = vmatpush1.msra.mxu0 0.0
  %155 = vmatprep.subr.mxu0 0.0
  %156 = vmatpush1.msra.mxu0 0.0
  %157 = vmatprep.subr.mxu0 0.0
  %158 = vmatpush1.msra.mxu0 0.0
  %159 = vmatprep.subr.mxu0 0.0
  %160 = vmatpush1.msra.mxu0 0.0
  %161 = vmatprep.subr.mxu0 0.0
  %162 = vmatpush1.msra.mxu0 0.0
  %163 = vmatprep.subr.mxu0 0.0
  %164 = vmatpush1.msra.mxu0 0.0
  %165 = vmatprep.subr.mxu0 0.0
  %166 = vmatpush1.msra.mxu0 0.0
  %167 = vmatprep.subr.mxu0 0.0
  %168 = vmatpush1.msra.mxu0 0.0
  %169 = vmatprep.subr.mxu0 0.0
  %170 = vmatpush1.msra.mxu0 0.0
  %171 = vmatprep.subr.mxu0 0.0
  %172 = vmatpush1.msra.mxu0 0.0
  %173 = vmatprep.subr.mxu0 0.0
  %174 = vmatpush1.msra.mxu0 0.0
  %175 = vmatprep.subr.mxu0 0.0
  %176 = vmatpush1.msra.mxu0 0.0
  %177 = vmatprep.subr.mxu0 0.0
  %178 = vmatpush1.msra.mxu0 0.0
  %179 = vmatprep.subr.mxu0 0.0
  %180 = vmatpush1.msra.mxu0 0.0
  %181 = vmatprep.subr.mxu0 0.0
  %182 = vmatpush1.msra.mxu0 0.0
  %183 = vmatprep.mubr.f32.mxu0 0.0
  %184 = vmatmul.mubr.f32.gmra.mrb[0].mxu0 %v117
  %v185 = vpop.f32.mrb[0].mxu0
  %v186 = vadd.f32 %v113, %v185
  %v187 = vpop.f32.mrb[0].mxu0
  %188 = vdwg.mxu0
  %vm189 = vcmask 31744
  %190 = vst.msk [vmem:[%s5] sm:$0xff] %vm189, %v186
  // Predicated region
  $region22: #{tpu_custom_call.1} parent=0 // pred_check
    _
  $region23: #{tpu_custom_call.1} parent=0 // pred_check_branch
    %192 = sbr.rel (0) target = $region25
  $region24: #{tpu_custom_call.1} parent=0 // pred_region
    _
  $region25: #{tpu_custom_call.1} parent=0 // pred_fallthru
    _
  // Predicated region
  $region26: #{tpu_custom_call.1} parent=0 // pred_check
    _
  $region27: #{tpu_custom_call.1} parent=0 // pred_check_branch
    %194 = sbr.rel (0) target = $region29
  $region28: #{tpu_custom_call.1} parent=0 // pred_region
    _
  $region29: #{tpu_custom_call.1} parent=0 // pred_fallthru
    _

</llo_original>
